<compile_context>
chip_gen: v5e
topology: v5e:2x2
jax: 0.10.0
libtpu: 0.0.40
codegen_flags: <defaults>
</compile_context>

<pallas_src>
import jax
import jax.numpy as jnp
from jax.experimental import pallas as pl
from jax.experimental.pallas import tpu as pltpu

LOG_STD_MIN = -10.0
LOG_STD_MAX = 2.0
HEAD_PAD = 128          # mu occupies lanes [0, 128); log_std occupies [128, 256)
BLOCK_B = 256           # batch tile (MXU height on v6e/v7x)


def actor_kernel(state_ref,
                 w1_ref, wvo_ref, w2_ref, wh_ref,
                 bias_ref,          # (4, 256) f32: [b1, b_vo, b2, b_heads]
                 out_ref):
    b1 = bias_ref[0:1, :]
    b_vo = bias_ref[1:2, :]
    b2 = bias_ref[2:3, :]
    b_h = bias_ref[3:4, :]

    # fc1 + ReLU  (bf16 MXU inputs, f32 accumulation)
    x = state_ref[...].astype(jnp.bfloat16)                               # (bt, S)
    h = jnp.dot(x, w1_ref[...], preferred_element_type=jnp.float32) + b1
    h = jnp.maximum(h, 0.0)                                               # (bt, H) f32

    # Attention (seq len 1): V-proj and out_proj pre-folded into W_vo.
    attn = jnp.dot(h.astype(jnp.bfloat16), wvo_ref[...],
                   preferred_element_type=jnp.float32) + b_vo

    # residual + LayerNorm normalize step (gamma/beta folded into fc2)
    y = h + attn
    mean = jnp.mean(y, axis=-1, keepdims=True)
    yc = y - mean
    var = jnp.mean(jnp.square(yc), axis=-1, keepdims=True)
    yn = yc * jax.lax.rsqrt(var + 1e-5)

    # fc2 (gamma/beta pre-folded) + ReLU
    z = jnp.dot(yn.astype(jnp.bfloat16), w2_ref[...],
                preferred_element_type=jnp.float32) + b2
    z = jnp.maximum(z, 0.0)

    # fused, 128-lane-padded heads: lanes [0,128) -> mu, lanes [128,256) -> log_std
    heads = jnp.dot(z.astype(jnp.bfloat16), wh_ref[...],
                    preferred_element_type=jnp.float32) + b_h             # (bt, 256)
    out_ref[:, :HEAD_PAD] = jnp.tanh(heads[:, :HEAD_PAD])
    out_ref[:, HEAD_PAD:] = jnp.clip(heads[:, HEAD_PAD:], LOG_STD_MIN, LOG_STD_MAX)


def _round_up(x, m):
    return (x + m - 1) // m * m


def actor_forward(state, fused, action_size, block_b=BLOCK_B):
    """state: (B, S) f32; fused: dict from fuse_actor_params. Returns (mu, log_std)."""
    B, S = state.shape
    H = fused["w1"].shape[1]
    OUT = fused["w_h"].shape[1]                      # == 2 * HEAD_PAD == 256

    # Pad the batch to a multiple of 8 (sublane) / block_b and tile it.
    Bp = _round_up(max(B, 1), 8)
    if Bp <= block_b:
        bt = Bp
    else:
        bt = block_b
        Bp = _round_up(B, block_b)
    if Bp != B:
        state = jnp.pad(state, ((0, Bp - B), (0, 0)))
    grid = (Bp // bt,)

    const = lambda i: (0, 0)                          # weights: VMEM-resident across tiles
    out = pl.pallas_call(
        actor_kernel,
        out_shape=jax.ShapeDtypeStruct((Bp, OUT), jnp.float32),
        grid=grid,
        in_specs=[
            pl.BlockSpec((bt, S), lambda i: (i, 0)),   # state tile
            pl.BlockSpec((S, H), const),               # w1
            pl.BlockSpec((H, H), const),               # w_vo
            pl.BlockSpec((H, H), const),               # w2
            pl.BlockSpec((H, OUT), const),             # w_h (padded heads)
            pl.BlockSpec((4, H), const),               # packed biases
        ],
        out_specs=pl.BlockSpec((bt, OUT), lambda i: (i, 0)),
        compiler_params=pltpu.CompilerParams(
            dimension_semantics=("parallel",)),
    )(state, fused["w1"], fused["w_vo"], fused["w2"], fused["w_h"], fused["biases"])

    mu = out[:B, :action_size]
    log_std = out[:B, HEAD_PAD:HEAD_PAD + action_size]
    return mu, log_std


def init_raw_params(key, state_size, action_size, hidden_size=256, num_heads=4):
    """Synthetic parameters with the same shapes/init ranges as the PyTorch module
    (PyTorch (out, in) convention). Only the V block of in_proj is generated —
    Q/K cannot influence the output at sequence length 1."""
    ks = jax.random.split(key, 12)

    def linear(kw, kb, fan_in, fan_out):
        bound = 1.0 / jnp.sqrt(float(fan_in))
        w = jax.random.uniform(kw, (fan_out, fan_in), jnp.float32, -bound, bound)
        b = jax.random.uniform(kb, (fan_out,), jnp.float32, -bound, bound)
        return w, b

    H, S, A = hidden_size, state_size, action_size
    w1, b1 = linear(ks[0], ks[1], S, H)                       # fc1
    wv, bv = linear(ks[2], ks[3], H, H)                       # attention V projection
    wo, bo = linear(ks[4], ks[5], H, H)                       # attention out_proj
    ln_g = jnp.ones((H,), jnp.float32)                        # LayerNorm weight
    ln_b = jnp.zeros((H,), jnp.float32)                       # LayerNorm bias
    w2, b2 = linear(ks[6], ks[7], H, H)                       # fc2
    w_mu, b_mu = linear(ks[8], ks[9], H, A)                   # mu head
    w_ls, b_ls = linear(ks[10], ks[11], H, A)                 # log_std head
    return dict(w1=w1, b1=b1, wv=wv, bv=bv, wo=wo, bo=bo,
                ln_g=ln_g, ln_b=ln_b, w2=w2, b2=b2,
                w_mu=w_mu, b_mu=b_mu, w_ls=w_ls, b_ls=b_ls)


def fuse_actor_params(raw, weight_dtype=jnp.bfloat16):
    """Exact algebraic folds (done in f32), then cast big matrices to bf16.
    Weights are laid out (in_features, out_features); biases packed (4, H) f32."""
    H = raw["w1"].shape[0]
    A = raw["w_mu"].shape[0]
    assert H == 2 * HEAD_PAD, "bias packing assumes hidden_size == 256"
    assert A <= HEAD_PAD

    w1 = raw["w1"].T                                          # (S, H)
    # attention: fold V projection + out_proj
    w_vo = raw["wv"].T @ raw["wo"].T                          # (H, H)
    b_vo = raw["bv"] @ raw["wo"].T + raw["bo"]                # (H,)
    # fold LayerNorm gamma/beta into fc2
    w2 = raw["ln_g"][:, None] * raw["w2"].T                   # (H, H)
    b2 = raw["ln_b"] @ raw["w2"].T + raw["b2"]                # (H,)
    # fused heads, padded to 128 lanes each: mu -> [0,A), log_std -> [128,128+A)
    w_h = jnp.zeros((H, 2 * HEAD_PAD), jnp.float32)
    w_h = w_h.at[:, :A].set(raw["w_mu"].T)
    w_h = w_h.at[:, HEAD_PAD:HEAD_PAD + A].set(raw["w_ls"].T)
    b_h = jnp.zeros((2 * HEAD_PAD,), jnp.float32)
    b_h = b_h.at[:A].set(raw["b_mu"])
    b_h = b_h.at[HEAD_PAD:HEAD_PAD + A].set(raw["b_ls"])

    biases = jnp.stack([raw["b1"], b_vo, b2, b_h], axis=0).astype(jnp.float32)  # (4, H)
    return dict(
        w1=w1.astype(weight_dtype),
        w_vo=w_vo.astype(weight_dtype),
        w2=w2.astype(weight_dtype),
        w_h=w_h.astype(weight_dtype),
        biases=biases,
    )


def actor_forward_ref(state, p):
    """Pure-JAX f32 reference replicating the PyTorch module's math
    (un-fused; seq-len-1 attention => softmax == 1 => attn == out_proj(V))."""
    h = jnp.maximum(state @ p["w1"].T + p["b1"], 0.0)
    v = h @ p["wv"].T + p["bv"]
    attn = v @ p["wo"].T + p["bo"]
    y = h + attn
    mean = jnp.mean(y, axis=-1, keepdims=True)
    var = jnp.mean(jnp.square(y - mean), axis=-1, keepdims=True)
    y = (y - mean) / jnp.sqrt(var + 1e-5) * p["ln_g"] + p["ln_b"]
    z = jnp.maximum(y @ p["w2"].T + p["b2"], 0.0)
    mu = jnp.tanh(z @ p["w_mu"].T + p["b_mu"])
    log_std = jnp.clip(z @ p["w_ls"].T + p["b_ls"], -10.0, 2.0)
    return mu, log_std


if __name__ == "__main__":
    STATE, ACTION, HIDDEN, HEADS = 16, 8, 256, 4

    key = jax.random.PRNGKey(0)
    k_small, k_big, k_params = jax.random.split(key, 3)
    raw = init_raw_params(k_params, STATE, ACTION, HIDDEN, HEADS)
    fused = fuse_actor_params(raw)

    # Small batch (single grid step, bt == padded B)
    B = 8
    state = jax.random.normal(k_small, (B, STATE), jnp.float32)
    mu, log_std = jax.block_until_ready(actor_forward(state, fused, ACTION))
    mu_ref, ls_ref = actor_forward_ref(state, raw)
    assert mu.shape == (B, ACTION) and log_std.shape == (B, ACTION)
    assert jnp.allclose(mu, mu_ref, rtol=2e-2, atol=2e-2)
    assert jnp.allclose(log_std, ls_ref, rtol=2e-2, atol=2e-2)

    # Larger batch exercises the batch-tiled grid (grid=(2,), weights VMEM-resident)
    B2 = 512
    state2 = jax.random.normal(k_big, (B2, STATE), jnp.float32)
    mu2, ls2 = jax.block_until_ready(actor_forward(state2, fused, ACTION))
    mu2_ref, ls2_ref = actor_forward_ref(state2, raw)
    assert mu2.shape == (B2, ACTION) and ls2.shape == (B2, ACTION)
    assert jnp.allclose(mu2, mu2_ref, rtol=2e-2, atol=2e-2)
    assert jnp.allclose(ls2, ls2_ref, rtol=2e-2, atol=2e-2)

    print("KERNEL_OK")
</pallas_src>

<mosaic_0001>
module attributes {stable_mosaic.version = 11 : i64} {
  func.func @actor_kernel(%arg0: i32, %arg1: memref<8x16xf32, #tpu.memory_space<vmem>>, %arg2: memref<16x256xbf16, #tpu.memory_space<vmem>>, %arg3: memref<256x256xbf16, #tpu.memory_space<vmem>>, %arg4: memref<256x256xbf16, #tpu.memory_space<vmem>>, %arg5: memref<256x256xbf16, #tpu.memory_space<vmem>>, %arg6: memref<4x256xf32, #tpu.memory_space<vmem>>, %arg7: memref<8x256xf32, #tpu.memory_space<vmem>>) attributes {dimension_semantics = [#tpu.dimension_semantics<parallel>], iteration_bounds = array<i64: 1>, scalar_prefetch = 0 : i64, scratch_operands = 0 : i64, tpu.core_type = #tpu.core_type<tc>, window_params = [{transform_indices = @transform_0, window_bounds = array<i64: 8, 16>}, {pipeline_mode = #tpu.pipeline_mode<synchronous>, transform_indices = @transform_1, window_bounds = array<i64: 16, 256>}, {pipeline_mode = #tpu.pipeline_mode<synchronous>, transform_indices = @transform_2, window_bounds = array<i64: 256, 256>}, {pipeline_mode = #tpu.pipeline_mode<synchronous>, transform_indices = @transform_3, window_bounds = array<i64: 256, 256>}, {pipeline_mode = #tpu.pipeline_mode<synchronous>, transform_indices = @transform_4, window_bounds = array<i64: 256, 256>}, {pipeline_mode = #tpu.pipeline_mode<synchronous>, transform_indices = @transform_5, window_bounds = array<i64: 4, 256>}, {transform_indices = @transform_6, window_bounds = array<i64: 8, 256>}]} {
    %c0 = arith.constant 0 : index
    %c0_0 = arith.constant 0 : index
    %0 = vector.load %arg6[%c0, %c0_0] : memref<4x256xf32, #tpu.memory_space<vmem>>, vector<1x256xf32>
    %c1 = arith.constant 1 : index
    %c0_1 = arith.constant 0 : index
    %1 = vector.load %arg6[%c1, %c0_1] : memref<4x256xf32, #tpu.memory_space<vmem>>, vector<1x256xf32>
    %c2 = arith.constant 2 : index
    %c0_2 = arith.constant 0 : index
    %2 = vector.load %arg6[%c2, %c0_2] : memref<4x256xf32, #tpu.memory_space<vmem>>, vector<1x256xf32>
    %c3 = arith.constant 3 : index
    %c0_3 = arith.constant 0 : index
    %3 = vector.load %arg6[%c3, %c0_3] : memref<4x256xf32, #tpu.memory_space<vmem>>, vector<1x256xf32>
    %c0_4 = arith.constant 0 : index
    %c0_5 = arith.constant 0 : index
    %4 = vector.load %arg1[%c0_4, %c0_5] : memref<8x16xf32, #tpu.memory_space<vmem>>, vector<8x16xf32>
    %5 = arith.truncf %4 : vector<8x16xf32> to vector<8x16xbf16>
    %c0_6 = arith.constant 0 : index
    %c0_7 = arith.constant 0 : index
    %6 = vector.load %arg2[%c0_6, %c0_7] : memref<16x256xbf16, #tpu.memory_space<vmem>>, vector<16x256xbf16>
    %cst = arith.constant dense<0.000000e+00> : vector<8x256xf32>
    %7 = tpu.matmul %5, %6, %cst {dimension_numbers = #tpu.dot_dimension_numbers<[1], [0], [0], [1], [0, 0, 1, 1], [], []>} : vector<8x16xbf16>, vector<16x256xbf16>, vector<8x256xf32> -> vector<8x256xf32>
    %8 = vector.broadcast %0 : vector<1x256xf32> to vector<8x256xf32>
    %9 = arith.addf %7, %8 : vector<8x256xf32>
    %cst_8 = arith.constant 0.000000e+00 : f32
    %10 = vector.broadcast %cst_8 : f32 to vector<8x256xf32>
    %11 = arith.maximumf %9, %10 : vector<8x256xf32>
    %12 = arith.truncf %11 : vector<8x256xf32> to vector<8x256xbf16>
    %c0_9 = arith.constant 0 : index
    %c0_10 = arith.constant 0 : index
    %13 = vector.load %arg3[%c0_9, %c0_10] : memref<256x256xbf16, #tpu.memory_space<vmem>>, vector<256x256xbf16>
    %cst_11 = arith.constant dense<0.000000e+00> : vector<8x256xf32>
    %14 = tpu.matmul %12, %13, %cst_11 {dimension_numbers = #tpu.dot_dimension_numbers<[1], [0], [0], [1], [0, 0, 1, 1], [], []>} : vector<8x256xbf16>, vector<256x256xbf16>, vector<8x256xf32> -> vector<8x256xf32>
    %15 = vector.broadcast %1 : vector<1x256xf32> to vector<8x256xf32>
    %16 = arith.addf %14, %15 : vector<8x256xf32>
    %17 = arith.addf %11, %16 : vector<8x256xf32>
    %cst_12 = arith.constant dense<0.000000e+00> : vector<8xf32>
    %18 = vector.multi_reduction <add>, %17, %cst_12 [1] : vector<8x256xf32> to vector<8xf32>
    %19 = vector.shape_cast %18 : vector<8xf32> to vector<8x1xf32>
    %cst_13 = arith.constant 2.560000e+02 : f32
    %20 = vector.broadcast %cst_13 : f32 to vector<8x1xf32>
    %21 = arith.divf %19, %20 : vector<8x1xf32>
    %22 = vector.broadcast %21 : vector<8x1xf32> to vector<8x256xf32>
    %23 = arith.subf %17, %22 : vector<8x256xf32>
    %24 = arith.mulf %23, %23 : vector<8x256xf32>
    %cst_14 = arith.constant dense<0.000000e+00> : vector<8xf32>
    %25 = vector.multi_reduction <add>, %24, %cst_14 [1] : vector<8x256xf32> to vector<8xf32>
    %26 = vector.shape_cast %25 : vector<8xf32> to vector<8x1xf32>
    %cst_15 = arith.constant 2.560000e+02 : f32
    %27 = vector.broadcast %cst_15 : f32 to vector<8x1xf32>
    %28 = arith.divf %26, %27 : vector<8x1xf32>
    %cst_16 = arith.constant 9.99999974E-6 : f32
    %29 = vector.broadcast %cst_16 : f32 to vector<8x1xf32>
    %30 = arith.addf %28, %29 : vector<8x1xf32>
    %31 = math.rsqrt %30 : vector<8x1xf32>
    %32 = vector.broadcast %31 : vector<8x1xf32> to vector<8x256xf32>
    %33 = arith.mulf %23, %32 : vector<8x256xf32>
    %34 = arith.truncf %33 : vector<8x256xf32> to vector<8x256xbf16>
    %c0_17 = arith.constant 0 : index
    %c0_18 = arith.constant 0 : index
    %35 = vector.load %arg4[%c0_17, %c0_18] : memref<256x256xbf16, #tpu.memory_space<vmem>>, vector<256x256xbf16>
    %cst_19 = arith.constant dense<0.000000e+00> : vector<8x256xf32>
    %36 = tpu.matmul %34, %35, %cst_19 {dimension_numbers = #tpu.dot_dimension_numbers<[1], [0], [0], [1], [0, 0, 1, 1], [], []>} : vector<8x256xbf16>, vector<256x256xbf16>, vector<8x256xf32> -> vector<8x256xf32>
    %37 = vector.broadcast %2 : vector<1x256xf32> to vector<8x256xf32>
    %38 = arith.addf %36, %37 : vector<8x256xf32>
    %cst_20 = arith.constant 0.000000e+00 : f32
    %39 = vector.broadcast %cst_20 : f32 to vector<8x256xf32>
    %40 = arith.maximumf %38, %39 : vector<8x256xf32>
    %41 = arith.truncf %40 : vector<8x256xf32> to vector<8x256xbf16>
    %c0_21 = arith.constant 0 : index
    %c0_22 = arith.constant 0 : index
    %42 = vector.load %arg5[%c0_21, %c0_22] : memref<256x256xbf16, #tpu.memory_space<vmem>>, vector<256x256xbf16>
    %cst_23 = arith.constant dense<0.000000e+00> : vector<8x256xf32>
    %43 = tpu.matmul %41, %42, %cst_23 {dimension_numbers = #tpu.dot_dimension_numbers<[1], [0], [0], [1], [0, 0, 1, 1], [], []>} : vector<8x256xbf16>, vector<256x256xbf16>, vector<8x256xf32> -> vector<8x256xf32>
    %44 = vector.broadcast %3 : vector<1x256xf32> to vector<8x256xf32>
    %45 = arith.addf %43, %44 : vector<8x256xf32>
    %46 = vector.extract_strided_slice %45 {offsets = [0, 0], sizes = [8, 128], strides = [1, 1]} : vector<8x256xf32> to vector<8x128xf32>
    %47 = math.tanh %46 : vector<8x128xf32>
    %c0_24 = arith.constant 0 : index
    %c0_25 = arith.constant 0 : index
    %48 = vector.load %arg7[%c0_24, %c0_25] : memref<8x256xf32, #tpu.memory_space<vmem>>, vector<8x128xf32>
    tpu.vector_store %arg7[%c0_24, %c0_25], %47 {strides = array<i32>} : memref<8x256xf32, #tpu.memory_space<vmem>>, vector<8x128xf32>,
    %49 = vector.extract_strided_slice %45 {offsets = [0, 128], sizes = [8, 128], strides = [1, 1]} : vector<8x256xf32> to vector<8x128xf32>
    %cst_26 = arith.constant -1.000000e+01 : f32
    %cst_27 = arith.constant 2.000000e+00 : f32
    %50 = vector.broadcast %cst_26 : f32 to vector<8x128xf32>
    %51 = arith.maximumf %50, %49 : vector<8x128xf32>
    %52 = vector.broadcast %cst_27 : f32 to vector<8x128xf32>
    %53 = arith.minimumf %52, %51 : vector<8x128xf32>
    %c0_28 = arith.constant 0 : index
    %c128 = arith.constant 128 : index
    %54 = vector.load %arg7[%c0_28, %c128] : memref<8x256xf32, #tpu.memory_space<vmem>>, vector<8x128xf32>
    tpu.vector_store %arg7[%c0_28, %c128], %53 {strides = array<i32>} : memref<8x256xf32, #tpu.memory_space<vmem>>, vector<8x128xf32>,
    return
  }
  func.func @transform_0(%arg0: i32) -> (i32, i32) {
    %c0_i32 = arith.constant 0 : i32
    %c0_i32_0 = arith.constant 0 : i32
    return %arg0, %c0_i32 : i32, i32
  }
  func.func @transform_1(%arg0: i32) -> (i32, i32) {
    %c0_i32 = arith.constant 0 : i32
    %c0_i32_0 = arith.constant 0 : i32
    %c0_i32_1 = arith.constant 0 : i32
    return %c0_i32, %c0_i32_0 : i32, i32
  }
  func.func @transform_2(%arg0: i32) -> (i32, i32) {
    %c0_i32 = arith.constant 0 : i32
    %c0_i32_0 = arith.constant 0 : i32
    %c0_i32_1 = arith.constant 0 : i32
    return %c0_i32, %c0_i32_0 : i32, i32
  }
  func.func @transform_3(%arg0: i32) -> (i32, i32) {
    %c0_i32 = arith.constant 0 : i32
    %c0_i32_0 = arith.constant 0 : i32
    %c0_i32_1 = arith.constant 0 : i32
    return %c0_i32, %c0_i32_0 : i32, i32
  }
  func.func @transform_4(%arg0: i32) -> (i32, i32) {
    %c0_i32 = arith.constant 0 : i32
    %c0_i32_0 = arith.constant 0 : i32
    %c0_i32_1 = arith.constant 0 : i32
    return %c0_i32, %c0_i32_0 : i32, i32
  }
  func.func @transform_5(%arg0: i32) -> (i32, i32) {
    %c0_i32 = arith.constant 0 : i32
    %c0_i32_0 = arith.constant 0 : i32
    %c0_i32_1 = arith.constant 0 : i32
    return %c0_i32, %c0_i32_0 : i32, i32
  }
  func.func @transform_6(%arg0: i32) -> (i32, i32) {
    %c0_i32 = arith.constant 0 : i32
    %c0_i32_0 = arith.constant 0 : i32
    return %arg0, %c0_i32 : i32, i32
  }
}

</mosaic_0001>

<llo_original>
// kernel: tpu_custom_call.1
$region0: #{tpu_custom_call.1}
  #allocation0 [shape = 'u32[]', space=smem, size = 0x4, offset = 0x4, fixed_abs, tag = 'smem constant byte address 0x4 - core index']
  #allocation1 [shape = 'u32[72,128]{1,0:T(1,128)}', space=vmem, size = 0x9000, scoped, tag = 'internal scratch']
  %s0 = inlined_call_operand.hbm [shape: f32[8,16], index: 0, kind: input, shape index: {}]
  %s1 = inlined_call_operand.hbm [shape: bf16[16,256], index: 1, kind: input, shape index: {}]
  %s2 = inlined_call_operand.hbm [shape: bf16[256,256], index: 2, kind: input, shape index: {}]
  %s3 = inlined_call_operand.hbm [shape: bf16[256,256], index: 3, kind: input, shape index: {}]
  %s4 = inlined_call_operand.hbm [shape: bf16[256,256], index: 4, kind: input, shape index: {}]
  %s5 = inlined_call_operand.hbm [shape: f32[4,256], index: 5, kind: input, shape index: {}]
  %s6 = inlined_call_operand.hbm [shape: f32[8,256], index: 6, kind: output, shape index: {}]
  %s7 = sld [smem:[#allocation0]]
  $region58: #{tpu_custom_call.1} parent=0
    _
  %s9 = ssub.s32 1, %s7
  %s10 = scalar_select 0, %s9, %s7
  $region1: #{tpu_custom_call.1} parent=0
    #allocation2 [shape = 'u8[4096]{0}', space=vmem, size = 0x1000, scoped, tag = 'input window, operand 0, single buffered']
    #allocation3 [shape = 's32[1]{0}', space=sflag, size = 0x4, scoped, tag = 'scoped memory for tpu_custom_call.1']
    #allocation4 [shape = 's32[1]{0}', space=sflag, size = 0x4, scoped, tag = 'scoped memory for tpu_custom_call.1']
    #allocation5 [shape = 'u8[8192]{0}', space=vmem, size = 0x2000, scoped, tag = 'input window, operand 1, single buffered']
    #allocation6 [shape = 's32[1]{0}', space=sflag, size = 0x4, scoped, tag = 'scoped memory for tpu_custom_call.1']
    #allocation7 [shape = 'u8[131072]{0}', space=vmem, size = 0x20000, scoped, tag = 'input window, operand 2, single buffered']
    #allocation8 [shape = 'u8[131072]{0}', space=vmem, size = 0x20000, scoped, tag = 'input window, operand 3, single buffered']
    #allocation9 [shape = 's32[1]{0}', space=sflag, size = 0x4, scoped, tag = 'scoped memory for tpu_custom_call.1']
    #allocation10 [shape = 'u8[131072]{0}', space=vmem, size = 0x20000, scoped, tag = 'input window, operand 4, single buffered']
    #allocation11 [shape = 'u8[4096]{0}', space=vmem, size = 0x1000, scoped, tag = 'input window, operand 5, single buffered']
    #allocation12 [shape = 's32[1]{0}', space=sflag, size = 0x4, scoped, tag = 'scoped memory for tpu_custom_call.1']
    #allocation13 [shape = 'u8[8192]{0}', space=vmem, size = 0x2000, scoped, tag = 'output window, operand 0, single buffered']
    %11 = vsyncpa [#allocation3], 0
    %12 = vsyncpa [#allocation6], 0
    %13 = vsyncpa [#allocation9], 0
    %14 = vsyncpa [#allocation12], 0
    %15 = vsyncpa [#allocation4], 0
    // Predicated region
    $region2: #{tpu_custom_call.1} parent=1 // pred_check
      _
    $region3: #{tpu_custom_call.1} parent=1 // pred_check_branch
      %17 = sbr.rel (0) target = $region5
    $region4: #{tpu_custom_call.1} parent=1 // pred_region
      %19 = vsyncadd [#allocation3], 0
      %s21 = sshll.u32 %s0, 4
      %s22 = int_to_ptr.hbm [resolvable:$true] %s21
      %s23 = sshll.u32 [#allocation2], 4
      %s24 = int_to_ptr.vmem [resolvable:$true] %s23
      %26 = dma.hbm_to_vmem [thread:$0]  %s22, 128, %s24, [#allocation3]
    $region5: #{tpu_custom_call.1} parent=1 // pred_fallthru
      _
    // Predicated region
    $region6: #{tpu_custom_call.1} parent=1 // pred_check
      _
    $region7: #{tpu_custom_call.1} parent=1 // pred_check_branch
      %28 = sbr.rel (0) target = $region9
    $region8: #{tpu_custom_call.1} parent=1 // pred_region
      %30 = vsyncadd [#allocation6], 0
      %s31 = sshll.u32 %s1, 4
      %s32 = int_to_ptr.hbm [resolvable:$true] %s31
      %s33 = sshll.u32 [#allocation5], 4
      %s34 = int_to_ptr.vmem [resolvable:$true] %s33
      %39 = dma.hbm_to_vmem [thread:$0]  %s32, 256, %s34, [#allocation6], 128, 128, 8
    $region9: #{tpu_custom_call.1} parent=1 // pred_fallthru
      _
    // Predicated region
    $region10: #{tpu_custom_call.1} parent=1 // pred_check
      _
    $region11: #{tpu_custom_call.1} parent=1 // pred_check_branch
      %41 = sbr.rel (0) target = $region13
    $region12: #{tpu_custom_call.1} parent=1 // pred_region
      %43 = vsyncadd [#allocation6], 0
      %s44 = sshll.u32 %s2, 4
      %s45 = int_to_ptr.hbm [resolvable:$true] %s44
      %s46 = sshll.u32 [#allocation7], 4
      %s47 = int_to_ptr.vmem [resolvable:$true] %s46
      %52 = dma.hbm_to_vmem [thread:$0]  %s45, 4096, %s47, [#allocation6], 128, 128, 8
    $region13: #{tpu_custom_call.1} parent=1 // pred_fallthru
      _
    // Predicated region
    $region14: #{tpu_custom_call.1} parent=1 // pred_check
      _
    $region15: #{tpu_custom_call.1} parent=1 // pred_check_branch
      %54 = sbr.rel (0) target = $region17
    $region16: #{tpu_custom_call.1} parent=1 // pred_region
      %56 = vsyncadd [#allocation9], 0
      %s57 = sshll.u32 %s3, 4
      %s58 = int_to_ptr.hbm [resolvable:$true] %s57
      %s59 = sshll.u32 [#allocation8], 4
      %s60 = int_to_ptr.vmem [resolvable:$true] %s59
      %65 = dma.hbm_to_vmem [thread:$0]  %s58, 4096, %s60, [#allocation9], 128, 128, 8
    $region17: #{tpu_custom_call.1} parent=1 // pred_fallthru
      _
    // Predicated region
    $region18: #{tpu_custom_call.1} parent=1 // pred_check
      _
    $region19: #{tpu_custom_call.1} parent=1 // pred_check_branch
      %67 = sbr.rel (0) target = $region21
    $region20: #{tpu_custom_call.1} parent=1 // pred_region
      %69 = vsyncadd [#allocation9], 0
      %s70 = sshll.u32 %s4, 4
      %s71 = int_to_ptr.hbm [resolvable:$true] %s70
      %s72 = sshll.u32 [#allocation10], 4
      %s73 = int_to_ptr.vmem [resolvable:$true] %s72
      %78 = dma.hbm_to_vmem [thread:$0]  %s71, 4096, %s73, [#allocation9], 128, 128, 8
    $region21: #{tpu_custom_call.1} parent=1 // pred_fallthru
      _
    // Predicated region
    $region22: #{tpu_custom_call.1} parent=1 // pred_check
      _
    $region23: #{tpu_custom_call.1} parent=1 // pred_check_branch
      %80 = sbr.rel (0) target = $region25
    $region24: #{tpu_custom_call.1} parent=1 // pred_region
      %82 = vsyncadd [#allocation12], 0
      %s84 = sshll.u32 %s5, 4
      %s85 = int_to_ptr.hbm [resolvable:$true] %s84
      %s86 = sshll.u32 [#allocation11], 4
      %s87 = int_to_ptr.vmem [resolvable:$true] %s86
      %89 = dma.hbm_to_vmem [thread:$0]  %s85, 128, %s87, [#allocation12]
    $region25: #{tpu_custom_call.1} parent=1 // pred_fallthru
      _
    // Predicated region
    $region26: #{tpu_custom_call.1} parent=1 // pred_check
      _
    $region27: #{tpu_custom_call.1} parent=1 // pred_check_branch
      %91 = sbr.rel (0) target = $region29
    $region28: #{tpu_custom_call.1} parent=1 // pred_region
      %93 = dma.done [#allocation3], 128
    $region29: #{tpu_custom_call.1} parent=1 // pred_fallthru
      _
    // Predicated region
    $region30: #{tpu_custom_call.1} parent=1 // pred_check
      _
    $region31: #{tpu_custom_call.1} parent=1 // pred_check_branch
      %95 = sbr.rel (0) target = $region33
    $region32: #{tpu_custom_call.1} parent=1 // pred_region
      %97 = dma.done [#allocation6], 256
    $region33: #{tpu_custom_call.1} parent=1 // pred_fallthru
      _
    // Predicated region
    $region34: #{tpu_custom_call.1} parent=1 // pred_check
      _
    $region35: #{tpu_custom_call.1} parent=1 // pred_check_branch
      %99 = sbr.rel (0) target = $region37
    $region36: #{tpu_custom_call.1} parent=1 // pred_region
      %101 = dma.done [#allocation6], 4096
    $region37: #{tpu_custom_call.1} parent=1 // pred_fallthru
      _
    // Predicated region
    $region38: #{tpu_custom_call.1} parent=1 // pred_check
      _
    $region39: #{tpu_custom_call.1} parent=1 // pred_check_branch
      %103 = sbr.rel (0) target = $region41
    $region40: #{tpu_custom_call.1} parent=1 // pred_region
      %105 = dma.done [#allocation9], 4096
    $region41: #{tpu_custom_call.1} parent=1 // pred_fallthru
      _
    // Predicated region
    $region42: #{tpu_custom_call.1} parent=1 // pred_check
      _
    $region43: #{tpu_custom_call.1} parent=1 // pred_check_branch
      %107 = sbr.rel (0) target = $region45
    $region44: #{tpu_custom_call.1} parent=1 // pred_region
      %109 = dma.done [#allocation9], 4096
    $region45: #{tpu_custom_call.1} parent=1 // pred_fallthru
      _
    // Predicated region
    $region46: #{tpu_custom_call.1} parent=1 // pred_check
      _
    $region47: #{tpu_custom_call.1} parent=1 // pred_check_branch
      %111 = sbr.rel (0) target = $region49
    $region48: #{tpu_custom_call.1} parent=1 // pred_region
      %113 = dma.done [#allocation12], 128
    $region49: #{tpu_custom_call.1} parent=1 // pred_fallthru
      _
    %v115 = vld [vmem:[#allocation11] ss:$4 sm:$0x3]
    %s116 = scalar_lea.vmem [#allocation11], 1
    %v117 = vld [vmem:[%s116] ss:$4 sm:$0x3]
    %s118 = scalar_lea.vmem [#allocation11], 2
    %v119 = vld [vmem:[%s118] ss:$4 sm:$0x3]
    %s120 = scalar_lea.vmem [#allocation11], 3
    %v121 = vld [vmem:[%s120] ss:$4 sm:$0x3]
    %v122 = vld [vmem:[#allocation2] sm:$0xff]
    %v123 = vpack.c.bf16 %v122, %v122
    %v124 = vld [vmem:[#allocation5] sm:$0xff]
    %v125 = vld [vmem:[#allocation5 + $0x8] sm:$0xff]
    %v127 = vperm.slane %v115, 0
    %v128 = vperm.slane %v115, 1
    %v133 = vunpack.c.l.b16 %v124
    %v134 = vunpack.c.h.b16 %v124
    %v135 = vunpack.c.l.b16 %v125
    %v136 = vunpack.c.h.b16 %v125
    %v137 = vpack.c.b16 %v135, %v133
    %v138 = vpack.c.b16 %v136, %v134
    %vm141 = vcmask 130048
    %v143 = vsel %vm141, %v123, 0
    %145 = vmatpush.bf16.msra.mxu0 0
    %146 = vmatpush.bf16.msra.mxu0 0
    %147 = vmatpush.bf16.msra.mxu0 0
    %148 = vmatpush.bf16.msra.mxu0 0
    %149 = vmatpush.bf16.msra.mxu0 0
    %150 = vmatpush.bf16.msra.mxu0 0
    %151 = vmatpush.bf16.msra.mxu0 0
    %152 = vmatpush.bf16.msra.mxu0 %v137
    %153 = vmatmul.bf16.gmra.mxu0 %v143
    %v154 = vpop.f32.mrf.mxu0
    %v155 = vadd.f32 %v127, %v154
    %v156 = vpop.f32.mrf.mxu0
    %157 = vdwg.mxu0
    %158 = vmatpush.bf16.msra.mxu0 0
    %159 = vmatpush.bf16.msra.mxu0 0
    %160 = vmatpush.bf16.msra.mxu0 0
    %161 = vmatpush.bf16.msra.mxu0 0
    %162 = vmatpush.bf16.msra.mxu0 0
    %163 = vmatpush.bf16.msra.mxu0 0
    %164 = vmatpush.bf16.msra.mxu0 0
    %165 = vmatpush.bf16.msra.mxu0 %v138
    %166 = vmatmul.bf16.gmra.mxu0 %v143
    %v167 = vpop.f32.mrf.mxu0
    %v168 = vadd.f32 %v128, %v167
    %v169 = vpop.f32.mrf.mxu0
    %170 = vdwg.mxu0
    %v171 = vmax.f32 %v155, 0.0
    %v172 = vmax.f32 %v168, 0.0
    %v173 = vpack.c.bf16 %v171, %v171
    %v174 = vpack.c.bf16 %v172, %v172
    %v175 = vld [vmem:[#allocation7] sm:$0xff]
    %v176 = vld [vmem:[#allocation7 + $0x8] sm:$0xff]
    %v177 = vld [vmem:[#allocation7 + $0x10] sm:$0xff]
    %v178 = vld [vmem:[#allocation7 + $0x18] sm:$0xff]
    %v179 = vld [vmem:[#allocation7 + $0x20] sm:$0xff]
    %v180 = vld [vmem:[#allocation7 + $0x28] sm:$0xff]
    %v181 = vld [vmem:[#allocation7 + $0x30] sm:$0xff]
    %v182 = vld [vmem:[#allocation7 + $0x38] sm:$0xff]
    %v183 = vld [vmem:[#allocation7 + $0x40] sm:$0xff]
    %v184 = vld [vmem:[#allocation7 + $0x48] sm:$0xff]
    %v185 = vld [vmem:[#allocation7 + $0x50] sm:$0xff]
    %v186 = vld [vmem:[#allocation7 + $0x58] sm:$0xff]
    %v187 = vld [vmem:[#allocation7 + $0x60] sm:$0xff]
    %v188 = vld [vmem:[#allocation7 + $0x68] sm:$0xff]
    %v189 = vld [vmem:[#allocation7 + $0x70] sm:$0xff]
    %v190 = vld [vmem:[#allocation7 + $0x78] sm:$0xff]
    %v191 = vld [vmem:[#allocation7 + $0x80] sm:$0xff]
    %v192 = vld [vmem:[#allocation7 + $0x88] sm:$0xff]
    %v193 = vld [vmem:[#allocation7 + $0x90] sm:$0xff]
    %v194 = vld [vmem:[#allocation7 + $0x98] sm:$0xff]
    %v195 = vld [vmem:[#allocation7 + $0xa0] sm:$0xff]
    %v196 = vld [vmem:[#allocation7 + $0xa8] sm:$0xff]
    %v197 = vld [vmem:[#allocation7 + $0xb0] sm:$0xff]
    %v198 = vld [vmem:[#allocation7 + $0xb8] sm:$0xff]
    %v199 = vld [vmem:[#allocation7 + $0xc0] sm:$0xff]
    %v200 = vld [vmem:[#allocation7 + $0xc8] sm:$0xff]
    %v201 = vld [vmem:[#allocation7 + $0xd0] sm:$0xff]
    %v202 = vld [vmem:[#allocation7 + $0xd8] sm:$0xff]
    %v203 = vld [vmem:[#allocation7 + $0xe0] sm:$0xff]
    %v204 = vld [vmem:[#allocation7 + $0xe8] sm:$0xff]
    %v205 = vld [vmem:[#allocation7 + $0xf0] sm:$0xff]
    %v206 = vld [vmem:[#allocation7 + $0xf8] sm:$0xff]
    %v208 = vperm.slane %v117, 0
    %v209 = vperm.slane %v117, 1
    %v244 = vunpack.c.l.b16 %v175
    %v245 = vunpack.c.h.b16 %v175
    %v246 = vunpack.c.l.b16 %v176
    %v247 = vunpack.c.h.b16 %v176
    %v248 = vunpack.c.l.b16 %v177
    %v249 = vunpack.c.h.b16 %v177
    %v250 = vunpack.c.l.b16 %v178
    %v251 = vunpack.c.h.b16 %v178
    %v252 = vunpack.c.l.b16 %v179
    %v253 = vunpack.c.h.b16 %v179
    %v254 = vunpack.c.l.b16 %v180
    %v255 = vunpack.c.h.b16 %v180
    %v256 = vunpack.c.l.b16 %v181
    %v257 = vunpack.c.h.b16 %v181
    %v258 = vunpack.c.l.b16 %v182
    %v259 = vunpack.c.h.b16 %v182
    %v260 = vunpack.c.l.b16 %v183
    %v261 = vunpack.c.h.b16 %v183
    %v262 = vunpack.c.l.b16 %v184
    %v263 = vunpack.c.h.b16 %v184
    %v264 = vunpack.c.l.b16 %v185
    %v265 = vunpack.c.h.b16 %v185
    %v266 = vunpack.c.l.b16 %v186
    %v267 = vunpack.c.h.b16 %v186
    %v268 = vunpack.c.l.b16 %v187
    %v269 = vunpack.c.h.b16 %v187
    %v270 = vunpack.c.l.b16 %v188
    %v271 = vunpack.c.h.b16 %v188
    %v272 = vunpack.c.l.b16 %v189
    %v273 = vunpack.c.h.b16 %v189
    %v274 = vunpack.c.l.b16 %v190
    %v275 = vunpack.c.h.b16 %v190
    %v276 = vunpack.c.l.b16 %v191
    %v277 = vunpack.c.h.b16 %v191
    %v278 = vunpack.c.l.b16 %v192
    %v279 = vunpack.c.h.b16 %v192
    %v280 = vunpack.c.l.b16 %v193
    %v281 = vunpack.c.h.b16 %v193
    %v282 = vunpack.c.l.b16 %v194
    %v283 = vunpack.c.h.b16 %v194
    %v284 = vunpack.c.l.b16 %v195
    %v285 = vunpack.c.h.b16 %v195
    %v286 = vunpack.c.l.b16 %v196
    %v287 = vunpack.c.h.b16 %v196
    %v288 = vunpack.c.l.b16 %v197
    %v289 = vunpack.c.h.b16 %v197
    %v290 = vunpack.c.l.b16 %v198
    %v291 = vunpack.c.h.b16 %v198
    %v292 = vunpack.c.l.b16 %v199
    %v293 = vunpack.c.h.b16 %v199
    %v294 = vunpack.c.l.b16 %v200
    %v295 = vunpack.c.h.b16 %v200
    %v296 = vunpack.c.l.b16 %v201
    %v297 = vunpack.c.h.b16 %v201
    %v298 = vunpack.c.l.b16 %v202
    %v299 = vunpack.c.h.b16 %v202
    %v300 = vunpack.c.l.b16 %v203
    %v301 = vunpack.c.h.b16 %v203
    %v302 = vunpack.c.l.b16 %v204
    %v303 = vunpack.c.h.b16 %v204
    %v304 = vunpack.c.l.b16 %v205
    %v305 = vunpack.c.h.b16 %v205
    %v306 = vunpack.c.l.b16 %v206
    %v307 = vunpack.c.h.b16 %v206
    %v308 = vpack.c.b16 %v246, %v244
    %v309 = vpack.c.b16 %v247, %v245
    %v310 = vpack.c.b16 %v250, %v248
    %v311 = vpack.c.b16 %v251, %v249
    %v312 = vpack.c.b16 %v254, %v252
    %v313 = vpack.c.b16 %v255, %v253
    %v314 = vpack.c.b16 %v258, %v256
    %v315 = vpack.c.b16 %v259, %v257
    %v316 = vpack.c.b16 %v262, %v260
    %v317 = vpack.c.b16 %v263, %v261
    %v318 = vpack.c.b16 %v266, %v264
    %v319 = vpack.c.b16 %v267, %v265
    %v320 = vpack.c.b16 %v270, %v268
    %v321 = vpack.c.b16 %v271, %v269
    %v322 = vpack.c.b16 %v274, %v272
    %v323 = vpack.c.b16 %v275, %v273
    %v324 = vpack.c.b16 %v278, %v276
    %v325 = vpack.c.b16 %v279, %v277
    %v326 = vpack.c.b16 %v282, %v280
    %v327 = vpack.c.b16 %v283, %v281
    %v328 = vpack.c.b16 %v286, %v284
    %v329 = vpack.c.b16 %v287, %v285
    %v330 = vpack.c.b16 %v290, %v288
    %v331 = vpack.c.b16 %v291, %v289
    %v332 = vpack.c.b16 %v294, %v292
    %v333 = vpack.c.b16 %v295, %v293
    %v334 = vpack.c.b16 %v298, %v296
    %v335 = vpack.c.b16 %v299, %v297
    %v336 = vpack.c.b16 %v302, %v300
    %v337 = vpack.c.b16 %v303, %v301
    %v338 = vpack.c.b16 %v306, %v304
    %v339 = vpack.c.b16 %v307, %v305
    %372 = vmatpush.bf16.msra.mxu0 %v322
    %373 = vmatpush.bf16.msra.mxu0 %v320
    %374 = vmatpush.bf16.msra.mxu0 %v318
    %375 = vmatpush.bf16.msra.mxu0 %v316
    %376 = vmatpush.bf16.msra.mxu0 %v314
    %377 = vmatpush.bf16.msra.mxu0 %v312
    %378 = vmatpush.bf16.msra.mxu0 %v310
    %379 = vmatpush.bf16.msra.mxu0 %v308
    %380 = vmatmul.bf16.gmra.mxu0 %v173
    %v381 = vpop.f32.mrf.mxu0
    %v382 = vadd.f32 %v208, %v381
    %v383 = vpop.f32.mrf.mxu0
    %384 = vdwg.mxu0
    %385 = vmatpush.bf16.msra.mxu0 %v338
    %386 = vmatpush.bf16.msra.mxu0 %v336
    %387 = vmatpush.bf16.msra.mxu0 %v334
    %388 = vmatpush.bf16.msra.mxu0 %v332
    %389 = vmatpush.bf16.msra.mxu0 %v330
    %390 = vmatpush.bf16.msra.mxu0 %v328
    %391 = vmatpush.bf16.msra.mxu0 %v326
    %392 = vmatpush.bf16.msra.mxu0 %v324
    %393 = vmatmul.bf16.gmra.mxu0 %v174
    %v394 = vpop.f32.mrf.mxu0
    %v395 = vadd.f32 %v382, %v394
    %v396 = vpop.f32.mrf.mxu0
    %397 = vdwg.mxu0
    %398 = vmatpush.bf16.msra.mxu0 %v323
    %399 = vmatpush.bf16.msra.mxu0 %v321
    %400 = vmatpush.bf16.msra.mxu0 %v319
    %401 = vmatpush.bf16.msra.mxu0 %v317
    %402 = vmatpush.bf16.msra.mxu0 %v315
    %403 = vmatpush.bf16.msra.mxu0 %v313
    %404 = vmatpush.bf16.msra.mxu0 %v311
    %405 = vmatpush.bf16.msra.mxu0 %v309
    %406 = vmatmul.bf16.gmra.mxu0 %v173
    %v407 = vpop.f32.mrf.mxu0
    %v408 = vadd.f32 %v209, %v407
    %v409 = vpop.f32.mrf.mxu0
    %410 = vdwg.mxu0
    %411 = vmatpush.bf16.msra.mxu0 %v339
    %412 = vmatpush.bf16.msra.mxu0 %v337
    %413 = vmatpush.bf16.msra.mxu0 %v335
    %414 = vmatpush.bf16.msra.mxu0 %v333
    %415 = vmatpush.bf16.msra.mxu0 %v331
    %416 = vmatpush.bf16.msra.mxu0 %v329
    %417 = vmatpush.bf16.msra.mxu0 %v327
    %418 = vmatpush.bf16.msra.mxu0 %v325
    %419 = vmatmul.bf16.gmra.mxu0 %v174
    %v420 = vpop.f32.mrf.mxu0
    %v421 = vadd.f32 %v408, %v420
    %v422 = vpop.f32.mrf.mxu0
    %423 = vdwg.mxu0
    %v424 = vadd.f32 %v171, %v395
    %v425 = vadd.f32 %v172, %v421
    %v426 = vadd.f32 %v424, %v425
    %427 = vadd.xlane.f32.xlu0 %v426
    %v428 = vpop.xlane.xlu0 %427
    %v429 = vrcp.pop 256.0
    %v430 = vmul.f32 256.0, %v429
    %v431 = vsub.f32 1.0, %v430
    %v432 = vmul.f32 %v429, %v431
    %v433 = vadd.f32 %v429, %v432
    %vm434 = vweird.f32 %v429
    %v435 = vsel %vm434, %v429, %v433
    %v436 = vmul.f32 %v428, %v435
    %v437 = vsub.f32 %v424, %v436
    %v438 = vsub.f32 %v425, %v436
    %v439 = vmul.f32 %v437, %v437
    %v440 = vmul.f32 %v438, %v438
    %v441 = vadd.f32 %v439, %v440
    %442 = vadd.xlane.f32.xlu0 %v441
    %v443 = vpop.xlane.xlu0 %442
    %v444 = vmul.f32 %v443, %v435
    %v445 = vadd.f32 %v444, 1e-05
    %v446 = vrsqrt.pop %v445
    %v447 = vmul.f32 %v446, %v445
    %v448 = vmul.f32 %v447, %v446
    %v449 = vmul.f32 0.5, %v448
    %v450 = vsub.f32 1.5, %v449
    %v451 = vmul.f32 %v446, %v450
    %vm452 = vweird.f32 %v445
    %vm453 = vweird.f32 %v446
    %vm454 = vmor %vm452, %vm453
    %v455 = vsel %vm454, %v446, %v451
    %v456 = vmul.f32 %v437, %v455
    %v457 = vmul.f32 %v438, %v455
    %v458 = vpack.c.bf16 %v456, %v456
    %v459 = vpack.c.bf16 %v457, %v457
    %v460 = vld [vmem:[#allocation8] sm:$0xff]
    %v461 = vld [vmem:[#allocation8 + $0x8] sm:$0xff]
    %v462 = vld [vmem:[#allocation8 + $0x10] sm:$0xff]
    %v463 = vld [vmem:[#allocation8 + $0x18] sm:$0xff]
    %v464 = vld [vmem:[#allocation8 + $0x20] sm:$0xff]
    %v465 = vld [vmem:[#allocation8 + $0x28] sm:$0xff]
    %v466 = vld [vmem:[#allocation8 + $0x30] sm:$0xff]
    %v467 = vld [vmem:[#allocation8 + $0x38] sm:$0xff]
    %v468 = vld [vmem:[#allocation8 + $0x40] sm:$0xff]
    %v469 = vld [vmem:[#allocation8 + $0x48] sm:$0xff]
    %v470 = vld [vmem:[#allocation8 + $0x50] sm:$0xff]
    %v471 = vld [vmem:[#allocation8 + $0x58] sm:$0xff]
    %v472 = vld [vmem:[#allocation8 + $0x60] sm:$0xff]
    %v473 = vld [vmem:[#allocation8 + $0x68] sm:$0xff]
    %v474 = vld [vmem:[#allocation8 + $0x70] sm:$0xff]
    %v475 = vld [vmem:[#allocation8 + $0x78] sm:$0xff]
    %v476 = vld [vmem:[#allocation8 + $0x80] sm:$0xff]
    %v477 = vld [vmem:[#allocation8 + $0x88] sm:$0xff]
    %v478 = vld [vmem:[#allocation8 + $0x90] sm:$0xff]
    %v479 = vld [vmem:[#allocation8 + $0x98] sm:$0xff]
    %v480 = vld [vmem:[#allocation8 + $0xa0] sm:$0xff]
    %v481 = vld [vmem:[#allocation8 + $0xa8] sm:$0xff]
    %v482 = vld [vmem:[#allocation8 + $0xb0] sm:$0xff]
    %v483 = vld [vmem:[#allocation8 + $0xb8] sm:$0xff]
    %v484 = vld [vmem:[#allocation8 + $0xc0] sm:$0xff]
    %v485 = vld [vmem:[#allocation8 + $0xc8] sm:$0xff]
    %v486 = vld [vmem:[#allocation8 + $0xd0] sm:$0xff]
    %v487 = vld [vmem:[#allocation8 + $0xd8] sm:$0xff]
    %v488 = vld [vmem:[#allocation8 + $0xe0] sm:$0xff]
    %v489 = vld [vmem:[#allocation8 + $0xe8] sm:$0xff]
    %v490 = vld [vmem:[#allocation8 + $0xf0] sm:$0xff]
    %v491 = vld [vmem:[#allocation8 + $0xf8] sm:$0xff]
    %v493 = vperm.slane %v119, 0
    %v494 = vperm.slane %v119, 1
    %v529 = vunpack.c.l.b16 %v460
    %v530 = vunpack.c.h.b16 %v460
    %v531 = vunpack.c.l.b16 %v461
    %v532 = vunpack.c.h.b16 %v461
    %v533 = vunpack.c.l.b16 %v462
    %v534 = vunpack.c.h.b16 %v462
    %v535 = vunpack.c.l.b16 %v463
    %v536 = vunpack.c.h.b16 %v463
    %v537 = vunpack.c.l.b16 %v464
    %v538 = vunpack.c.h.b16 %v464
    %v539 = vunpack.c.l.b16 %v465
    %v540 = vunpack.c.h.b16 %v465
    %v541 = vunpack.c.l.b16 %v466
    %v542 = vunpack.c.h.b16 %v466
    %v543 = vunpack.c.l.b16 %v467
    %v544 = vunpack.c.h.b16 %v467
    %v545 = vunpack.c.l.b16 %v468
    %v546 = vunpack.c.h.b16 %v468
    %v547 = vunpack.c.l.b16 %v469
    %v548 = vunpack.c.h.b16 %v469
    %v549 = vunpack.c.l.b16 %v470
    %v550 = vunpack.c.h.b16 %v470
    %v551 = vunpack.c.l.b16 %v471
    %v552 = vunpack.c.h.b16 %v471
    %v553 = vunpack.c.l.b16 %v472
    %v554 = vunpack.c.h.b16 %v472
    %v555 = vunpack.c.l.b16 %v473
    %v556 = vunpack.c.h.b16 %v473
    %v557 = vunpack.c.l.b16 %v474
    %v558 = vunpack.c.h.b16 %v474
    %v559 = vunpack.c.l.b16 %v475
    %v560 = vunpack.c.h.b16 %v475
    %v561 = vunpack.c.l.b16 %v476
    %v562 = vunpack.c.h.b16 %v476
    %v563 = vunpack.c.l.b16 %v477
    %v564 = vunpack.c.h.b16 %v477
    %v565 = vunpack.c.l.b16 %v478
    %v566 = vunpack.c.h.b16 %v478
    %v567 = vunpack.c.l.b16 %v479
    %v568 = vunpack.c.h.b16 %v479
    %v569 = vunpack.c.l.b16 %v480
    %v570 = vunpack.c.h.b16 %v480
    %v571 = vunpack.c.l.b16 %v481
    %v572 = vunpack.c.h.b16 %v481
    %v573 = vunpack.c.l.b16 %v482
    %v574 = vunpack.c.h.b16 %v482
    %v575 = vunpack.c.l.b16 %v483
    %v576 = vunpack.c.h.b16 %v483
    %v577 = vunpack.c.l.b16 %v484
    %v578 = vunpack.c.h.b16 %v484
    %v579 = vunpack.c.l.b16 %v485
    %v580 = vunpack.c.h.b16 %v485
    %v581 = vunpack.c.l.b16 %v486
    %v582 = vunpack.c.h.b16 %v486
    %v583 = vunpack.c.l.b16 %v487
    %v584 = vunpack.c.h.b16 %v487
    %v585 = vunpack.c.l.b16 %v488
    %v586 = vunpack.c.h.b16 %v488
    %v587 = vunpack.c.l.b16 %v489
    %v588 = vunpack.c.h.b16 %v489
    %v589 = vunpack.c.l.b16 %v490
    %v590 = vunpack.c.h.b16 %v490
    %v591 = vunpack.c.l.b16 %v491
    %v592 = vunpack.c.h.b16 %v491
    %v593 = vpack.c.b16 %v531, %v529
    %v594 = vpack.c.b16 %v532, %v530
    %v595 = vpack.c.b16 %v535, %v533
    %v596 = vpack.c.b16 %v536, %v534
    %v597 = vpack.c.b16 %v539, %v537
    %v598 = vpack.c.b16 %v540, %v538
    %v599 = vpack.c.b16 %v543, %v541
    %v600 = vpack.c.b16 %v544, %v542
    %v601 = vpack.c.b16 %v547, %v545
    %v602 = vpack.c.b16 %v548, %v546
    %v603 = vpack.c.b16 %v551, %v549
    %v604 = vpack.c.b16 %v552, %v550
    %v605 = vpack.c.b16 %v555, %v553
    %v606 = vpack.c.b16 %v556, %v554
    %v607 = vpack.c.b16 %v559, %v557
    %v608 = vpack.c.b16 %v560, %v558
    %v609 = vpack.c.b16 %v563, %v561
    %v610 = vpack.c.b16 %v564, %v562
    %v611 = vpack.c.b16 %v567, %v565
    %v612 = vpack.c.b16 %v568, %v566
    %v613 = vpack.c.b16 %v571, %v569
    %v614 = vpack.c.b16 %v572, %v570
    %v615 = vpack.c.b16 %v575, %v573
    %v616 = vpack.c.b16 %v576, %v574
    %v617 = vpack.c.b16 %v579, %v577
    %v618 = vpack.c.b16 %v580, %v578
    %v619 = vpack.c.b16 %v583, %v581
    %v620 = vpack.c.b16 %v584, %v582
    %v621 = vpack.c.b16 %v587, %v585
    %v622 = vpack.c.b16 %v588, %v586
    %v623 = vpack.c.b16 %v591, %v589
    %v624 = vpack.c.b16 %v592, %v590
    %657 = vmatpush.bf16.msra.mxu0 %v607
    %658 = vmatpush.bf16.msra.mxu0 %v605
    %659 = vmatpush.bf16.msra.mxu0 %v603
    %660 = vmatpush.bf16.msra.mxu0 %v601
    %661 = vmatpush.bf16.msra.mxu0 %v599
    %662 = vmatpush.bf16.msra.mxu0 %v597
    %663 = vmatpush.bf16.msra.mxu0 %v595
    %664 = vmatpush.bf16.msra.mxu0 %v593
    %665 = vmatmul.bf16.gmra.mxu0 %v458
    %v666 = vpop.f32.mrf.mxu0
    %v667 = vadd.f32 %v493, %v666
    %v668 = vpop.f32.mrf.mxu0
    %669 = vdwg.mxu0
    %670 = vmatpush.bf16.msra.mxu0 %v623
    %671 = vmatpush.bf16.msra.mxu0 %v621
    %672 = vmatpush.bf16.msra.mxu0 %v619
    %673 = vmatpush.bf16.msra.mxu0 %v617
    %674 = vmatpush.bf16.msra.mxu0 %v615
    %675 = vmatpush.bf16.msra.mxu0 %v613
    %676 = vmatpush.bf16.msra.mxu0 %v611
    %677 = vmatpush.bf16.msra.mxu0 %v609
    %678 = vmatmul.bf16.gmra.mxu0 %v459
    %v679 = vpop.f32.mrf.mxu0
    %v680 = vadd.f32 %v667, %v679
    %v681 = vpop.f32.mrf.mxu0
    %682 = vdwg.mxu0
    %683 = vmatpush.bf16.msra.mxu0 %v608
    %684 = vmatpush.bf16.msra.mxu0 %v606
    %685 = vmatpush.bf16.msra.mxu0 %v604
    %686 = vmatpush.bf16.msra.mxu0 %v602
    %687 = vmatpush.bf16.msra.mxu0 %v600
    %688 = vmatpush.bf16.msra.mxu0 %v598
    %689 = vmatpush.bf16.msra.mxu0 %v596
    %690 = vmatpush.bf16.msra.mxu0 %v594
    %691 = vmatmul.bf16.gmra.mxu0 %v458
    %v692 = vpop.f32.mrf.mxu0
    %v693 = vadd.f32 %v494, %v692
    %v694 = vpop.f32.mrf.mxu0
    %695 = vdwg.mxu0
    %696 = vmatpush.bf16.msra.mxu0 %v624
    %697 = vmatpush.bf16.msra.mxu0 %v622
    %698 = vmatpush.bf16.msra.mxu0 %v620
    %699 = vmatpush.bf16.msra.mxu0 %v618
    %700 = vmatpush.bf16.msra.mxu0 %v616
    %701 = vmatpush.bf16.msra.mxu0 %v614
    %702 = vmatpush.bf16.msra.mxu0 %v612
    %703 = vmatpush.bf16.msra.mxu0 %v610
    %704 = vmatmul.bf16.gmra.mxu0 %v459
    %v705 = vpop.f32.mrf.mxu0
    %v706 = vadd.f32 %v693, %v705
    %v707 = vpop.f32.mrf.mxu0
    %708 = vdwg.mxu0
    %v709 = vmax.f32 %v680, 0.0
    %v710 = vmax.f32 %v706, 0.0
    %v711 = vpack.c.bf16 %v709, %v709
    %v712 = vpack.c.bf16 %v710, %v710
    %v713 = vld [vmem:[#allocation10] sm:$0xff]
    %v714 = vld [vmem:[#allocation10 + $0x8] sm:$0xff]
    %v715 = vld [vmem:[#allocation10 + $0x10] sm:$0xff]
    %v716 = vld [vmem:[#allocation10 + $0x18] sm:$0xff]
    %v717 = vld [vmem:[#allocation10 + $0x20] sm:$0xff]
    %v718 = vld [vmem:[#allocation10 + $0x28] sm:$0xff]
    %v719 = vld [vmem:[#allocation10 + $0x30] sm:$0xff]
    %v720 = vld [vmem:[#allocation10 + $0x38] sm:$0xff]
    %v721 = vld [vmem:[#allocation10 + $0x40] sm:$0xff]
    %v722 = vld [vmem:[#allocation10 + $0x48] sm:$0xff]
    %v723 = vld [vmem:[#allocation10 + $0x50] sm:$0xff]
    %v724 = vld [vmem:[#allocation10 + $0x58] sm:$0xff]
    %v725 = vld [vmem:[#allocation10 + $0x60] sm:$0xff]
    %v726 = vld [vmem:[#allocation10 + $0x68] sm:$0xff]
    %v727 = vld [vmem:[#allocation10 + $0x70] sm:$0xff]
    %v728 = vld [vmem:[#allocation10 + $0x78] sm:$0xff]
    %v729 = vld [vmem:[#allocation10 + $0x80] sm:$0xff]
    %v730 = vld [vmem:[#allocation10 + $0x88] sm:$0xff]
    %v731 = vld [vmem:[#allocation10 + $0x90] sm:$0xff]
    %v732 = vld [vmem:[#allocation10 + $0x98] sm:$0xff]
    %v733 = vld [vmem:[#allocation10 + $0xa0] sm:$0xff]
    %v734 = vld [vmem:[#allocation10 + $0xa8] sm:$0xff]
    %v735 = vld [vmem:[#allocation10 + $0xb0] sm:$0xff]
    %v736 = vld [vmem:[#allocation10 + $0xb8] sm:$0xff]
    %v737 = vld [vmem:[#allocation10 + $0xc0] sm:$0xff]
    %v738 = vld [vmem:[#allocation10 + $0xc8] sm:$0xff]
    %v739 = vld [vmem:[#allocation10 + $0xd0] sm:$0xff]
    %v740 = vld [vmem:[#allocation10 + $0xd8] sm:$0xff]
    %v741 = vld [vmem:[#allocation10 + $0xe0] sm:$0xff]
    %v742 = vld [vmem:[#allocation10 + $0xe8] sm:$0xff]
    %v743 = vld [vmem:[#allocation10 + $0xf0] sm:$0xff]
    %v744 = vld [vmem:[#allocation10 + $0xf8] sm:$0xff]
    %v746 = vperm.slane %v121, 0
    %v747 = vperm.slane %v121, 1
    %v782 = vunpack.c.l.b16 %v713
    %v783 = vunpack.c.h.b16 %v713
    %v784 = vunpack.c.l.b16 %v714
    %v785 = vunpack.c.h.b16 %v714
    %v786 = vunpack.c.l.b16 %v715
    %v787 = vunpack.c.h.b16 %v715
    %v788 = vunpack.c.l.b16 %v716
    %v789 = vunpack.c.h.b16 %v716
    %v790 = vunpack.c.l.b16 %v717
    %v791 = vunpack.c.h.b16 %v717
    %v792 = vunpack.c.l.b16 %v718
    %v793 = vunpack.c.h.b16 %v718
    %v794 = vunpack.c.l.b16 %v719
    %v795 = vunpack.c.h.b16 %v719
    %v796 = vunpack.c.l.b16 %v720
    %v797 = vunpack.c.h.b16 %v720
    %v798 = vunpack.c.l.b16 %v721
    %v799 = vunpack.c.h.b16 %v721
    %v800 = vunpack.c.l.b16 %v722
    %v801 = vunpack.c.h.b16 %v722
    %v802 = vunpack.c.l.b16 %v723
    %v803 = vunpack.c.h.b16 %v723
    %v804 = vunpack.c.l.b16 %v724
    %v805 = vunpack.c.h.b16 %v724
    %v806 = vunpack.c.l.b16 %v725
    %v807 = vunpack.c.h.b16 %v725
    %v808 = vunpack.c.l.b16 %v726
    %v809 = vunpack.c.h.b16 %v726
    %v810 = vunpack.c.l.b16 %v727
    %v811 = vunpack.c.h.b16 %v727
    %v812 = vunpack.c.l.b16 %v728
    %v813 = vunpack.c.h.b16 %v728
    %v814 = vunpack.c.l.b16 %v729
    %v815 = vunpack.c.h.b16 %v729
    %v816 = vunpack.c.l.b16 %v730
    %v817 = vunpack.c.h.b16 %v730
    %v818 = vunpack.c.l.b16 %v731
    %v819 = vunpack.c.h.b16 %v731
    %v820 = vunpack.c.l.b16 %v732
    %v821 = vunpack.c.h.b16 %v732
    %v822 = vunpack.c.l.b16 %v733
    %v823 = vunpack.c.h.b16 %v733
    %v824 = vunpack.c.l.b16 %v734
    %v825 = vunpack.c.h.b16 %v734
    %v826 = vunpack.c.l.b16 %v735
    %v827 = vunpack.c.h.b16 %v735
    %v828 = vunpack.c.l.b16 %v736
    %v829 = vunpack.c.h.b16 %v736
    %v830 = vunpack.c.l.b16 %v737
    %v831 = vunpack.c.h.b16 %v737
    %v832 = vunpack.c.l.b16 %v738
    %v833 = vunpack.c.h.b16 %v738
    %v834 = vunpack.c.l.b16 %v739
    %v835 = vunpack.c.h.b16 %v739
    %v836 = vunpack.c.l.b16 %v740
    %v837 = vunpack.c.h.b16 %v740
    %v838 = vunpack.c.l.b16 %v741
    %v839 = vunpack.c.h.b16 %v741
    %v840 = vunpack.c.l.b16 %v742
    %v841 = vunpack.c.h.b16 %v742
    %v842 = vunpack.c.l.b16 %v743
    %v843 = vunpack.c.h.b16 %v743
    %v844 = vunpack.c.l.b16 %v744
    %v845 = vunpack.c.h.b16 %v744
    %v846 = vpack.c.b16 %v784, %v782
    %v847 = vpack.c.b16 %v785, %v783
    %v848 = vpack.c.b16 %v788, %v786
    %v849 = vpack.c.b16 %v789, %v787
    %v850 = vpack.c.b16 %v792, %v790
    %v851 = vpack.c.b16 %v793, %v791
    %v852 = vpack.c.b16 %v796, %v794
    %v853 = vpack.c.b16 %v797, %v795
    %v854 = vpack.c.b16 %v800, %v798
    %v855 = vpack.c.b16 %v801, %v799
    %v856 = vpack.c.b16 %v804, %v802
    %v857 = vpack.c.b16 %v805, %v803
    %v858 = vpack.c.b16 %v808, %v806
    %v859 = vpack.c.b16 %v809, %v807
    %v860 = vpack.c.b16 %v812, %v810
    %v861 = vpack.c.b16 %v813, %v811
    %v862 = vpack.c.b16 %v816, %v814
    %v863 = vpack.c.b16 %v817, %v815
    %v864 = vpack.c.b16 %v820, %v818
    %v865 = vpack.c.b16 %v821, %v819
    %v866 = vpack.c.b16 %v824, %v822
    %v867 = vpack.c.b16 %v825, %v823
    %v868 = vpack.c.b16 %v828, %v826
    %v869 = vpack.c.b16 %v829, %v827
    %v870 = vpack.c.b16 %v832, %v830
    %v871 = vpack.c.b16 %v833, %v831
    %v872 = vpack.c.b16 %v836, %v834
    %v873 = vpack.c.b16 %v837, %v835
    %v874 = vpack.c.b16 %v840, %v838
    %v875 = vpack.c.b16 %v841, %v839
    %v876 = vpack.c.b16 %v844, %v842
    %v877 = vpack.c.b16 %v845, %v843
    %910 = vmatpush.bf16.msra.mxu0 %v860
    %911 = vmatpush.bf16.msra.mxu0 %v858
    %912 = vmatpush.bf16.msra.mxu0 %v856
    %913 = vmatpush.bf16.msra.mxu0 %v854
    %914 = vmatpush.bf16.msra.mxu0 %v852
    %915 = vmatpush.bf16.msra.mxu0 %v850
    %916 = vmatpush.bf16.msra.mxu0 %v848
    %917 = vmatpush.bf16.msra.mxu0 %v846
    %918 = vmatmul.bf16.gmra.mxu0 %v711
    %v919 = vpop.f32.mrf.mxu0
    %v920 = vadd.f32 %v746, %v919
    %v921 = vpop.f32.mrf.mxu0
    %922 = vdwg.mxu0
    %923 = vmatpush.bf16.msra.mxu0 %v876
    %924 = vmatpush.bf16.msra.mxu0 %v874
    %925 = vmatpush.bf16.msra.mxu0 %v872
    %926 = vmatpush.bf16.msra.mxu0 %v870
    %927 = vmatpush.bf16.msra.mxu0 %v868
    %928 = vmatpush.bf16.msra.mxu0 %v866
    %929 = vmatpush.bf16.msra.mxu0 %v864
    %930 = vmatpush.bf16.msra.mxu0 %v862
    %931 = vmatmul.bf16.gmra.mxu0 %v712
    %v932 = vpop.f32.mrf.mxu0
    %v933 = vadd.f32 %v920, %v932
    %v934 = vpop.f32.mrf.mxu0
    %935 = vdwg.mxu0
    %936 = vmatpush.bf16.msra.mxu0 %v861
    %937 = vmatpush.bf16.msra.mxu0 %v859
    %938 = vmatpush.bf16.msra.mxu0 %v857
    %939 = vmatpush.bf16.msra.mxu0 %v855
    %940 = vmatpush.bf16.msra.mxu0 %v853
    %941 = vmatpush.bf16.msra.mxu0 %v851
    %942 = vmatpush.bf16.msra.mxu0 %v849
    %943 = vmatpush.bf16.msra.mxu0 %v847
    %944 = vmatmul.bf16.gmra.mxu0 %v711
    %v945 = vpop.f32.mrf.mxu0
    %v946 = vadd.f32 %v747, %v945
    %v947 = vpop.f32.mrf.mxu0
    %948 = vdwg.mxu0
    %949 = vmatpush.bf16.msra.mxu0 %v877
    %950 = vmatpush.bf16.msra.mxu0 %v875
    %951 = vmatpush.bf16.msra.mxu0 %v873
    %952 = vmatpush.bf16.msra.mxu0 %v871
    %953 = vmatpush.bf16.msra.mxu0 %v869
    %954 = vmatpush.bf16.msra.mxu0 %v867
    %955 = vmatpush.bf16.msra.mxu0 %v865
    %956 = vmatpush.bf16.msra.mxu0 %v863
    %957 = vmatmul.bf16.gmra.mxu0 %v712
    %v958 = vpop.f32.mrf.mxu0
    %v959 = vadd.f32 %v946, %v958
    %v960 = vpop.f32.mrf.mxu0
    %961 = vdwg.mxu0
    %v962 = vtanh.pop %v933
    %963 = vst [vmem:[#allocation13] sm:$0xff] %v962
    %v964 = vmax.f32 %v959, -10.0
    %v965 = vmin.f32 %v964, 2.0
    %966 = vst [vmem:[#allocation13 + $0x8] sm:$0xff] %v965
    // Predicated region
    $region50: #{tpu_custom_call.1} parent=1 // pred_check
      _
    $region51: #{tpu_custom_call.1} parent=1 // pred_check_branch
      %968 = sbr.rel (0) target = $region53
    $region52: #{tpu_custom_call.1} parent=1 // pred_region
      %970 = vsyncadd [#allocation4], 0
      %s972 = sshll.u32 [#allocation13], 4
      %s973 = int_to_ptr.vmem [resolvable:$true] %s972
      %s974 = sshll.u32 %s6, 4
      %s975 = int_to_ptr.hbm [resolvable:$true] %s974
      %977 = dma.vmem_to_hbm [thread:$0]  %s973, 256, %s975, [#allocation4]
    $region53: #{tpu_custom_call.1} parent=1 // pred_fallthru
      _
    // Predicated region
    $region54: #{tpu_custom_call.1} parent=1 // pred_check
      _
    $region55: #{tpu_custom_call.1} parent=1 // pred_check_branch
      %979 = sbr.rel (0) target = $region57
    $region56: #{tpu_custom_call.1} parent=1 // pred_region
      %981 = dma.done [#allocation4], 256
    $region57: #{tpu_custom_call.1} parent=1 // pred_fallthru
      _
    %982 = vsyncpa [#allocation3], 1
    %983 = vsyncpa [#allocation6], 1
    %984 = vsyncpa [#allocation9], 1
    %985 = vsyncpa [#allocation12], 1
    %986 = vsyncpa [#allocation4], 1

</llo_original>
